<compile_context>
chip_gen: v6e
topology: v6e:2x2x1
jax: 0.10.0
libtpu: 0.0.40
codegen_flags: <defaults>
</compile_context>

<pallas_src>
import jax
import jax.numpy as jnp
from jax import lax
from jax.experimental import pallas as pl
from jax.experimental.pallas import tpu as pltpu


def _affine_kernel(x_ref, scale_ref, shift_ref, o_ref):
    # x_ref: (Rt, Lt); scale/shift: (Rt, 1) [per-row] or (1, Lt) [per-lane].
    x = x_ref[...].astype(jnp.float32)
    y = x * scale_ref[...] + shift_ref[...]
    o_ref[...] = y.astype(o_ref.dtype)


def _vmem_config():
    """Return (tile_budget_bytes, vmem_limit_bytes) tuned per TPU generation."""
    try:
        cap = int(pltpu.get_tpu_info().vmem_capacity_bytes)
    except Exception:
        cap = 64 * 1024 * 1024  # conservative fallback (v7x per-TC size)
    # Declared scoped-VMEM limit: ~3/4 of physical, capped.
    #   v5e / v6e (128 MiB phys) -> 96 MiB;  v7x (64 MiB phys) -> 48 MiB.
    vmem_limit = int(min(cap * 3 // 4, 96 * 1024 * 1024))
    # Budget for the double-buffered streaming tiles, with 20% headroom.
    tile_budget = int(vmem_limit * 4 // 5)
    return tile_budget, vmem_limit


def _pick_tiles(R, L, in_itemsize, out_itemsize, tile_budget):
    """Pick (Rt, Lt) satisfying the (8, 128) block rules within the budget."""
    per_elem = 2 * (in_itemsize + out_itemsize)  # in + out, each double-buffered
    row_unit = 8 if R >= 8 else R

    # Lane tile: keep lanes full (lane-dense, unmasked stores) whenever a
    # row_unit-row slab of the full lane width fits; else multiple-of-128 tile.
    if row_unit * L * per_elem <= tile_budget or L <= 128:
        Lt = L
    else:
        Lt = max(128, (tile_budget // (row_unit * per_elem)) // 128 * 128)
        Lt = min(Lt, L)

    # Row tile: largest multiple of 8 (or full R) that fits the budget.
    max_rows = max(1, tile_budget // (Lt * per_elem))
    if max_rows >= R:
        Rt = R
    else:
        Rt = max(row_unit, (max_rows // 8) * 8)

    # Keep >= 2 grid steps when everything fits in one tile so both v7x
    # TensorCores get work (negligible cost on single-TC v5e/v6e).
    if Rt >= R and Lt >= L and R >= 16:
        Rt = ((R // 2 + 7) // 8) * 8
    return Rt, Lt


def frozen_batch_norm_2d(x, weight, bias, running_mean, running_var,
                         eps=1e-5, donate_input=False):
    """x: (N, C, H, W); weight/bias/running_mean/running_var: (C,)."""
    N, C, H, W = x.shape
    HW = H * W
    f32 = jnp.float32

    # Per-channel affine params (tiny wrapper-side ops, not activation work).
    scale_c = weight.astype(f32) * lax.rsqrt(running_var.astype(f32) + f32(eps))
    shift_c = bias.astype(f32) - running_mean.astype(f32) * scale_c

    lane_dense = (HW % 128 == 0) and HW >= 128
    if lane_dense:
        # rows = N*C (sublane-dense regardless of C), lanes = H*W.
        R, L = N * C, HW
        x2d = x.reshape(R, L)
        scale2d = jnp.tile(scale_c, N).reshape(R, 1)
        shift2d = jnp.tile(shift_c, N).reshape(R, 1)

        def param_spec(Rt, Lt):
            return pl.BlockSpec((Rt, 1), lambda r, l: (r, 0))
    else:
        # Small / ragged feature maps: fold C into the lane axis so stores
        # stay lane-dense; params become per-lane vectors of length C*HW.
        R, L = N, C * HW
        x2d = x.reshape(R, L)
        scale2d = jnp.repeat(scale_c, HW).reshape(1, L)
        shift2d = jnp.repeat(shift_c, HW).reshape(1, L)

        def param_spec(Rt, Lt):
            return pl.BlockSpec((1, Lt), lambda r, l: (0, l))

    tile_budget, vmem_limit = _vmem_config()
    itemsize = jnp.dtype(x.dtype).itemsize
    Rt, Lt = _pick_tiles(R, L, itemsize, itemsize, tile_budget)
    grid = (pl.cdiv(R, Rt), pl.cdiv(L, Lt))
    p_spec = param_spec(Rt, Lt)

    out2d = pl.pallas_call(
        _affine_kernel,
        out_shape=jax.ShapeDtypeStruct((R, L), x.dtype),
        grid=grid,
        in_specs=[
            pl.BlockSpec((Rt, Lt), lambda r, l: (r, l)),
            p_spec,
            p_spec,
        ],
        out_specs=pl.BlockSpec((Rt, Lt), lambda r, l: (r, l)),
        compiler_params=pltpu.CompilerParams(
            dimension_semantics=("parallel", "parallel"),
            vmem_limit_bytes=vmem_limit),
        input_output_aliases=({0: 0} if donate_input else {}),
    )(x2d, scale2d, shift2d)

    return out2d.reshape(N, C, H, W)


def _reference(x, weight, bias, running_mean, running_var, eps=1e-5):
    # Pure-JAX mirror of the PyTorch forward.
    w = weight.reshape(1, -1, 1, 1)
    b = bias.reshape(1, -1, 1, 1)
    rv = running_var.reshape(1, -1, 1, 1)
    rm = running_mean.reshape(1, -1, 1, 1)
    scale = w * lax.rsqrt(rv + eps)
    shift = b - rm * scale
    return x * scale + shift


def _make_inputs(key, N, C, H, W):
    kx, kw, kb, km, kv = jax.random.split(key, 5)
    x = jax.random.normal(kx, (N, C, H, W), dtype=jnp.float32)
    weight = 1.0 + 0.1 * jax.random.normal(kw, (C,), dtype=jnp.float32)
    bias = 0.1 * jax.random.normal(kb, (C,), dtype=jnp.float32)
    running_mean = 0.1 * jax.random.normal(km, (C,), dtype=jnp.float32)
    running_var = 0.5 + jnp.abs(jax.random.normal(kv, (C,), dtype=jnp.float32))
    return x, weight, bias, running_mean, running_var


if __name__ == "__main__":
    key = jax.random.PRNGKey(0)
    k0, k1 = jax.random.split(key)

    # Primary case: lane-dense layout (HW = 256 is a multiple of 128).
    x, w, b, rm, rv = _make_inputs(k0, 2, 4, 16, 16)
    out = jax.block_until_ready(frozen_batch_norm_2d(x, w, b, rm, rv))
    ref = _reference(x, w, b, rm, rv)
    assert out.shape == x.shape
    assert jnp.allclose(out, ref, atol=1e-5, rtol=1e-5), "mismatch (lane-dense)"

    # Secondary case: small 7x7 feature map, C not a multiple of 8 ->
    # exercises the folded (N, C*HW) lane-dense fallback path.
    x2, w2, b2, rm2, rv2 = _make_inputs(k1, 2, 5, 7, 7)
    out2 = jax.block_until_ready(frozen_batch_norm_2d(x2, w2, b2, rm2, rv2))
    ref2 = _reference(x2, w2, b2, rm2, rv2)
    assert out2.shape == x2.shape
    assert jnp.allclose(out2, ref2, atol=1e-5, rtol=1e-5), "mismatch (fallback)"

    print("KERNEL_OK")
</pallas_src>

<mosaic_0001>
module attributes {stable_mosaic.version = 11 : i64} {
  func.func @_affine_kernel(%arg0: i32, %arg1: i32, %arg2: memref<8x256xf32, #tpu.memory_space<vmem>>, %arg3: memref<8x1xf32, #tpu.memory_space<vmem>>, %arg4: memref<8x1xf32, #tpu.memory_space<vmem>>, %arg5: memref<8x256xf32, #tpu.memory_space<vmem>>) attributes {dimension_semantics = [#tpu.dimension_semantics<parallel>, #tpu.dimension_semantics<parallel>], iteration_bounds = array<i64: 1, 1>, scalar_prefetch = 0 : i64, scratch_operands = 0 : i64, tpu.core_type = #tpu.core_type<tc>, window_params = [{transform_indices = @transform_0, window_bounds = array<i64: 8, 256>}, {transform_indices = @transform_1, window_bounds = array<i64: 8, 1>}, {transform_indices = @transform_2, window_bounds = array<i64: 8, 1>}, {transform_indices = @transform_3, window_bounds = array<i64: 8, 256>}]} {
    %c0 = arith.constant 0 : index
    %c0_0 = arith.constant 0 : index
    %0 = vector.load %arg2[%c0, %c0_0] : memref<8x256xf32, #tpu.memory_space<vmem>>, vector<8x256xf32>
    %c0_1 = arith.constant 0 : index
    %c0_2 = arith.constant 0 : index
    %1 = vector.load %arg3[%c0_1, %c0_2] : memref<8x1xf32, #tpu.memory_space<vmem>>, vector<8x1xf32>
    %2 = vector.broadcast %1 : vector<8x1xf32> to vector<8x256xf32>
    %3 = arith.mulf %0, %2 : vector<8x256xf32>
    %c0_3 = arith.constant 0 : index
    %c0_4 = arith.constant 0 : index
    %4 = vector.load %arg4[%c0_3, %c0_4] : memref<8x1xf32, #tpu.memory_space<vmem>>, vector<8x1xf32>
    %5 = vector.broadcast %4 : vector<8x1xf32> to vector<8x256xf32>
    %6 = arith.addf %3, %5 : vector<8x256xf32>
    %c0_5 = arith.constant 0 : index
    %c0_6 = arith.constant 0 : index
    %7 = vector.load %arg5[%c0_5, %c0_6] : memref<8x256xf32, #tpu.memory_space<vmem>>, vector<8x256xf32>
    tpu.vector_store %arg5[%c0_5, %c0_6], %6 {strides = array<i32>} : memref<8x256xf32, #tpu.memory_space<vmem>>, vector<8x256xf32>,
    return
  }
  func.func @transform_0(%arg0: i32, %arg1: i32) -> (i32, i32) {
    %c0_i32 = arith.constant 0 : i32
    return %arg0, %arg1 : i32, i32
  }
  func.func @transform_1(%arg0: i32, %arg1: i32) -> (i32, i32) {
    %c0_i32 = arith.constant 0 : i32
    %c0_i32_0 = arith.constant 0 : i32
    return %arg0, %c0_i32 : i32, i32
  }
  func.func @transform_2(%arg0: i32, %arg1: i32) -> (i32, i32) {
    %c0_i32 = arith.constant 0 : i32
    %c0_i32_0 = arith.constant 0 : i32
    return %arg0, %c0_i32 : i32, i32
  }
  func.func @transform_3(%arg0: i32, %arg1: i32) -> (i32, i32) {
    %c0_i32 = arith.constant 0 : i32
    return %arg0, %arg1 : i32, i32
  }
}

</mosaic_0001>

<llo_original>
// kernel: tpu_custom_call.1
$region0: #{tpu_custom_call.1}
  #allocation0 [shape = 'u32[]', space=smem, size = 0x4, offset = 0x4, fixed_abs, tag = 'smem constant byte address 0x4 - core index']
  #allocation1 [shape = 'u32[144,128]{1,0:T(1,128)}', space=vmem, size = 0x12000, scoped, tag = 'internal scratch']
  %s0 = inlined_call_operand.vmem [shape: f32[8,256], index: 0, kind: input, shape index: {}]
  %s1 = inlined_call_operand.vmem [shape: f32[8,1], index: 1, kind: input, shape index: {}]
  %s2 = inlined_call_operand.vmem [shape: f32[8,1], index: 2, kind: input, shape index: {}]
  %s3 = inlined_call_operand.hbm [shape: f32[8,256], index: 3, kind: output, shape index: {}]
  %s4 = sld [smem:[#allocation0]]
  $region22: #{tpu_custom_call.1} parent=0
    _
  %s6 = ssub.s32 1, %s4
  %s7 = scalar_select 0, %s6, %s4
  $region1: #{tpu_custom_call.1} parent=0
    #allocation2 [shape = 'u8[8192]{0}', space=vmem, size = 0x2000, scoped, tag = 'output window, operand 0, single buffered']
    #allocation3 [shape = 's32[1]{0}', space=sflag, size = 0x4, scoped, tag = 'scoped memory for tpu_custom_call.1']
    %8 = vsyncpa [#allocation3], 0
    // Predicated region
    $region2: #{tpu_custom_call.1} parent=1 // pred_check
      _
    $region3: #{tpu_custom_call.1} parent=1 // pred_check_branch
      %10 = sbr.rel (0) target = $region5
    $region4: #{tpu_custom_call.1} parent=1 // pred_region
      _
    $region5: #{tpu_custom_call.1} parent=1 // pred_fallthru
      _
    // Predicated region
    $region6: #{tpu_custom_call.1} parent=1 // pred_check
      _
    $region7: #{tpu_custom_call.1} parent=1 // pred_check_branch
      %12 = sbr.rel (0) target = $region9
    $region8: #{tpu_custom_call.1} parent=1 // pred_region
      _
    $region9: #{tpu_custom_call.1} parent=1 // pred_fallthru
      _
    // Predicated region
    $region10: #{tpu_custom_call.1} parent=1 // pred_check
      _
    $region11: #{tpu_custom_call.1} parent=1 // pred_check_branch
      %14 = sbr.rel (0) target = $region13
    $region12: #{tpu_custom_call.1} parent=1 // pred_region
      _
    $region13: #{tpu_custom_call.1} parent=1 // pred_fallthru
      _
    %v15 = vld [vmem:[%s0] sm:$0xff]
    %v16 = vld [vmem:[%s0 + $0x8] sm:$0xff]
    %v17 = vld [vmem:[%s1] sm:$0xff]
    %19 = vset.pattern.permute.xlu0 0
    %20 = vperm.xlu0 %19, %v17
    %v21 = vpop.permute.xlu0 %20
    %v23 = vmul.f32 %v15, %v21
    %v24 = vmul.f32 %v16, %v21
    %v25 = vld [vmem:[%s2] sm:$0xff]
    %27 = vset.pattern.permute.xlu0 0
    %28 = vperm.xlu0 %27, %v25
    %v29 = vpop.permute.xlu0 %28
    %v31 = vadd.f32 %v23, %v29
    %v32 = vadd.f32 %v24, %v29
    %33 = vst [vmem:[#allocation2] sm:$0xff] %v31
    %34 = vst [vmem:[#allocation2 + $0x8] sm:$0xff] %v32
    // Predicated region
    $region14: #{tpu_custom_call.1} parent=1 // pred_check
      _
    $region15: #{tpu_custom_call.1} parent=1 // pred_check_branch
      %36 = sbr.rel (0) target = $region17
    $region16: #{tpu_custom_call.1} parent=1 // pred_region
      %s38 = ssub.s32 256, 256
      %39 = vsyncadd [#allocation3], %s38
      %s41 = sshll.u32 [#allocation2], 4
      %s42 = int_to_ptr.vmem [resolvable:$true] %s41
      %44 = dma.vmem_to_hbm [thread:$0]  %s42, 256, %s3, [#allocation3]
    $region17: #{tpu_custom_call.1} parent=1 // pred_fallthru
      _
    // Predicated region
    $region18: #{tpu_custom_call.1} parent=1 // pred_check
      _
    $region19: #{tpu_custom_call.1} parent=1 // pred_check_branch
      %46 = sbr.rel (0) target = $region21
    $region20: #{tpu_custom_call.1} parent=1 // pred_region
      %47 = dma.done [#allocation3], 256
    $region21: #{tpu_custom_call.1} parent=1 // pred_fallthru
      _
    %48 = vsyncpa [#allocation3], 1

</llo_original>
